<compile_context>
chip_gen: v6e
topology: v6e:2x2x1
jax: 0.10.0
libtpu: 0.0.40
codegen_flags: <defaults>
</compile_context>

<pallas_src>
import functools

import jax
import jax.numpy as jnp
from jax import lax
from jax.experimental import pallas as pl
from jax.experimental.pallas import tpu as pltpu


def _round_up(x, m):
    return ((x + m - 1) // m) * m


def _int_pow(x, p):
    """x**p using VPU multiplies when p is a non-negative integer.

    jnp.power with a float exponent lowers to exp(p*log(x)) on the EUP and
    NaNs for x < 0; lax.integer_pow is pure VPU.
    """
    ip = int(round(float(p)))
    if abs(float(p) - ip) < 1e-12 and ip >= 0:
        return lax.integer_pow(x, ip)
    return jnp.power(x, p)


def _vmem_capacity_bytes():
    """Physical VMEM per core; conservative fallback (true for v7x)."""
    try:
        return int(pltpu.get_tpu_info().vmem_capacity_bytes)
    except Exception:
        return 64 << 20


def _choose_tiling(hw, budget_lanes, n_splits):
    """Pick lane-tile T (multiple of 128) and the padded spatial size."""
    budget_lanes = max(128, (budget_lanes // 128) * 128)
    budget_lanes = min(budget_lanes, 32768)  # diminishing returns past ~32k lanes
    # Prefer an exact divisor of hw (avoids a wrapper-side padding pass).
    if hw % (128 * n_splits) == 0:
        per_split = hw // n_splits
        lim = min(per_split, budget_lanes)
        best = 0
        t = 128
        while t <= lim:
            if per_split % t == 0:
                best = t
            t += 128
        if best and (best >= 1024 or best * 2 >= lim):
            return best, hw
    # Otherwise zero-pad the spatial axis (padding contributes exactly 0).
    t = min(budget_lanes, _round_up((hw + n_splits - 1) // n_splits, 128))
    hw_pad = _round_up(hw, n_splits * t)
    return t, hw_pad


def _make_loss_kernel(num_classes: int, alpha: float, beta: float):
    nc = num_classes

    def kernel(mo_ref, tgt_ref, out_ref,
               kp_acc, focal_acc, off_n_acc, off_s_acc, sz_n_acc, sz_s_acc):
        h = pl.program_id(2)
        nh = pl.num_programs(2)

        @pl.when(h == 0)
        def _init():
            kp_acc[...] = jnp.zeros_like(kp_acc)
            focal_acc[...] = jnp.zeros_like(focal_acc)
            off_n_acc[...] = jnp.zeros_like(off_n_acc)
            off_s_acc[...] = jnp.zeros_like(off_s_acc)
            sz_n_acc[...] = jnp.zeros_like(sz_n_acc)
            sz_s_acc[...] = jnp.zeros_like(sz_s_acc)

        mo = mo_ref[0].astype(jnp.float32)   # (C, T)
        gt = tgt_ref[0].astype(jnp.float32)  # (C, T)

        # Channel masks from a tiny (C, 1) iota, broadcast once per mask.
        c_col = lax.broadcasted_iota(jnp.int32, (mo.shape[0], 1), 0)
        hm_mask = jnp.broadcast_to(c_col < nc, mo.shape)
        off_mask = jnp.broadcast_to((c_col >= nc) & (c_col < nc + 2), mo.shape)
        sz_mask = jnp.broadcast_to((c_col >= nc + 2) & (c_col < nc + 4), mo.shape)

        # ---- focal heatmap term: one EUP log per element ----------------------
        pos = (gt == 1.0) & hm_mask
        one_m_o = 1.0 - mo
        logv = jnp.log(jnp.where(pos, mo, one_m_o) + 1e-5)
        coef = jnp.where(pos, _int_pow(one_m_o, alpha),
                         _int_pow(1.0 - gt, beta) * _int_pow(mo, alpha))
        # Any NaN on non-heatmap rows is discarded by the outer select
        # (forward-pass value semantics, identical to the reference).
        focal_acc[...] += jnp.where(hm_mask, coef * logv, 0.0)
        kp_acc[...] += jnp.where(pos, 1.0, 0.0)
        # Sublane+lane reductions of focal/kp are deferred to the finalize step.

        # ---- masked per-pixel L1 (offset / size heads) ------------------------
        absdiff = jnp.abs(mo - gt)
        absgt = jnp.abs(gt)

        def accum_l1(mask, n_acc, s_acc):
            gt_l1 = jnp.sum(jnp.where(mask, absgt, 0.0), axis=0, keepdims=True)
            l1 = jnp.sum(jnp.where(mask, absdiff, 0.0), axis=0, keepdims=True)
            valid = gt_l1 != 0.0
            n_acc[...] += jnp.where(valid, 1.0, 0.0)
            s_acc[...] += jnp.where(valid, l1, 0.0)

        accum_l1(off_mask, off_n_acc, off_s_acc)
        accum_l1(sz_mask, sz_n_acc, sz_s_acc)

        # ---- finalize: partial sums for this (image, split), lane-dense block --
        @pl.when(h == nh - 1)
        def _fin():
            kp = jnp.sum(kp_acc[...])
            focal = jnp.sum(focal_acc[...])
            off_n = jnp.sum(off_n_acc[...])
            off_s = jnp.sum(off_s_acc[...])
            sz_n = jnp.sum(sz_n_acc[...])
            sz_s = jnp.sum(sz_s_acc[...])
            row = lax.broadcasted_iota(jnp.int32, out_ref.shape, 2)
            out_ref[...] = jnp.where(
                row == 0, kp,
                jnp.where(row == 1, focal,
                          jnp.where(row == 2, off_n,
                                    jnp.where(row == 3, off_s,
                                              jnp.where(row == 4, sz_n, sz_s)))))

    return kernel


def loss_forward(model_output, target, *, lamda_size, lamda_off,
                 num_classes, alpha, beta):
    """Pallas equivalent of Loss.forward.  Inputs are NCHW.

    Streams the caller's dtype (pass bf16 to halve HBM traffic, especially on
    v5e); all arithmetic is f32 in VMEM.  Note: an image with zero keypoints
    yields inf/nan in the heatmap loss, matching the PyTorch reference.
    """
    B, C, H, W = model_output.shape
    assert C >= num_classes + 4
    assert model_output.dtype == target.dtype
    HW = H * W
    itemsize = jnp.dtype(model_output.dtype).itemsize

    # --- VMEM budgeting (per-generation aware) --------------------------------
    cap = _vmem_capacity_bytes()                   # 128 MiB v5e/v6e, 64 MiB v7x
    vmem_limit = max(24 << 20, cap - (16 << 20))   # leave headroom off physical
    budget = max(8 << 20, vmem_limit - (12 << 20))  # headroom for Mosaic internals

    sub = 8 * max(1, 4 // itemsize)                # sublane packing of the input dtype
    c_pad_in = _round_up(C, sub)
    c_pad32 = _round_up(C, 8)
    per_lane = (2 * 2 * c_pad_in * itemsize        # 2 inputs x 2 pipeline buffers
                + 2 * c_pad32 * 4                  # kp/focal (C, T) f32 accumulators
                + 4 * 8 * 4)                       # four (1, T) f32 accumulators (padded)
    budget_lanes = budget // per_lane

    # Split the spatial axis when B == 1 so v7x's two TensorCores both get work.
    n_splits = 2 if B == 1 else 1
    T, HW_pad = _choose_tiling(HW, budget_lanes, n_splits)
    n_tiles = HW_pad // T
    tiles_per_split = n_tiles // n_splits

    mo2 = model_output.reshape(B, C, HW)
    tg2 = target.reshape(B, C, HW)
    if HW_pad != HW:
        padw = ((0, 0), (0, 0), (0, HW_pad - HW))
        mo2 = jnp.pad(mo2, padw)   # zero padding contributes exactly 0 everywhere
        tg2 = jnp.pad(tg2, padw)

    kernel = _make_loss_kernel(num_classes, float(alpha), float(beta))
    in_spec = pl.BlockSpec((1, C, T),
                           lambda b, s, h: (b, 0, s * tiles_per_split + h))
    out_spec = pl.BlockSpec((1, 1, 8, 128), lambda b, s, h: (b, s, 0, 0))

    parts = pl.pallas_call(
        kernel,
        out_shape=jax.ShapeDtypeStruct((B, n_splits, 8, 128), jnp.float32),
        grid=(B, n_splits, tiles_per_split),
        in_specs=[in_spec, in_spec],
        out_specs=out_spec,
        scratch_shapes=[pltpu.VMEM((C, T), jnp.float32),   # kp
                        pltpu.VMEM((C, T), jnp.float32),   # focal
                        pltpu.VMEM((1, T), jnp.float32),   # off N
                        pltpu.VMEM((1, T), jnp.float32),   # off sum
                        pltpu.VMEM((1, T), jnp.float32),   # size N
                        pltpu.VMEM((1, T), jnp.float32)],  # size sum
        compiler_params=pltpu.CompilerParams(
            dimension_semantics=("parallel", "parallel", "arbitrary"),
            vmem_limit_bytes=int(vmem_limit)),
    )(mo2, tg2)

    sums = parts[:, :, :6, 0].sum(axis=1)          # combine spatial splits -> (B, 6)
    kp, focal, off_n, off_s, sz_n, sz_s = (sums[:, i] for i in range(6))
    heatmap_loss = jnp.mean(-focal / kp)           # kp==0 -> inf/nan, as in PyTorch
    offset_loss = jnp.mean(off_s / (off_n + 1e-4))
    size_loss = jnp.mean(sz_s / (sz_n + 1e-4))
    loss = heatmap_loss + lamda_size * size_loss + lamda_off * offset_loss
    return loss, heatmap_loss, size_loss, offset_loss


# ----------------------- pure-JAX reference (for checking) -----------------------
def loss_reference(model_output, target, *, lamda_size, lamda_off,
                   num_classes, alpha, beta):
    nc = num_classes
    model_output = model_output.astype(jnp.float32)
    target = target.astype(jnp.float32)
    hm_out, hm_gt = model_output[:, :nc], target[:, :nc]
    off_out, off_gt = model_output[:, nc:nc + 2], target[:, nc:nc + 2]
    sz_out, sz_gt = model_output[:, nc + 2:nc + 4], target[:, nc + 2:nc + 4]

    pos = hm_gt == 1.0
    kp = jnp.sum(pos, axis=(1, 2, 3)).astype(jnp.float32)
    lp = -jnp.sum(jnp.where(pos, (1 - hm_out) ** alpha * jnp.log(hm_out + 1e-5), 0.0),
                  axis=(1, 2, 3))
    ln = -jnp.sum(jnp.where(pos, 0.0,
                            (1 - hm_gt) ** beta * hm_out ** alpha
                            * jnp.log(1 - hm_out + 1e-5)),
                  axis=(1, 2, 3))
    heatmap_loss = jnp.mean((lp + ln) / kp)

    def masked(o, g):
        m = jnp.sum(jnp.abs(g), axis=1) != 0
        l1 = jnp.sum(jnp.abs(o - g), axis=1)
        n = jnp.sum(m, axis=(1, 2)).astype(jnp.float32)
        s = jnp.sum(jnp.where(m, l1, 0.0), axis=(1, 2))
        return jnp.mean(s / (n + 1e-4))

    offset_loss = masked(off_out, off_gt)
    size_loss = masked(sz_out, sz_gt)
    loss = heatmap_loss + lamda_size * size_loss + lamda_off * offset_loss
    return loss, heatmap_loss, size_loss, offset_loss


def _make_inputs(key, B, num_classes, H, W):
    C = num_classes + 4
    k1, k2, k3, k4, k5 = jax.random.split(key, 5)
    # Model output: values in (0,1) like sigmoid heatmap / regression heads.
    model_output = jax.nn.sigmoid(jax.random.normal(k1, (B, C, H, W), jnp.float32))
    # Heatmap GT: values in (0,1) with a sparse set of exact 1.0 keypoints.
    hm_gt = jax.random.uniform(k2, (B, num_classes, H, W), jnp.float32) * 0.9
    pos_mask = jax.random.uniform(k3, (B, num_classes, H, W)) > 0.97
    hm_gt = jnp.where(pos_mask, 1.0, hm_gt)
    hm_gt = hm_gt.at[:, 0, 0, 0].set(1.0)  # guarantee >=1 keypoint per image
    # Offset / size GT: sparse non-zero pixels.
    sparse = jax.random.uniform(k4, (B, 1, H, W)) > 0.9
    offsz_gt = jnp.where(sparse, jax.random.normal(k5, (B, 4, H, W), jnp.float32), 0.0)
    target = jnp.concatenate([hm_gt, offsz_gt], axis=1)
    return model_output, target


if __name__ == "__main__":
    num_classes = 4
    alpha, beta = 2.0, 4.0
    lamda_size, lamda_off = 0.1, 1.0

    fwd = functools.partial(loss_forward, lamda_size=lamda_size,
                            lamda_off=lamda_off, num_classes=num_classes,
                            alpha=alpha, beta=beta)
    ref_fn = functools.partial(loss_reference, lamda_size=lamda_size,
                               lamda_off=lamda_off, num_classes=num_classes,
                               alpha=alpha, beta=beta)

    key = jax.random.PRNGKey(0)
    cases = [
        (2, 16, 16, jnp.float32),    # small spatial, single tile
        (2, 64, 64, jnp.float32),    # larger single tile
        (2, 250, 250, jnp.float32),  # HW % 128 != 0 -> zero-pad + multi-tile accumulate
        (1, 128, 128, jnp.float32),  # B == 1 -> 2-way spatial split (v7x both cores)
        (2, 64, 64, jnp.bfloat16),   # bf16 streaming path (f32 math in VMEM)
    ]
    for (B, H, W, dt) in cases:
        key, sub = jax.random.split(key)
        model_output, target = _make_inputs(sub, B, num_classes, H, W)
        model_output = model_output.astype(dt)
        target = target.astype(dt)
        out = jax.block_until_ready(fwd(model_output, target))
        ref = ref_fn(model_output, target)
        for name, a, b in zip(("loss", "heatmap", "size", "offset"), out, ref):
            if not jnp.allclose(a, b, rtol=2e-4, atol=1e-5):
                raise AssertionError(
                    f"mismatch {name} (B={B},H={H},W={W},dtype={dt}): "
                    f"pallas={a} ref={b}")

    print("KERNEL_OK")
</pallas_src>

<mosaic_0001>
module attributes {stable_mosaic.version = 11 : i64} {
  func.func @kernel(%arg0: i32, %arg1: i32, %arg2: i32, %arg3: memref<1x8x256xf32, #tpu.memory_space<vmem>>, %arg4: memref<1x8x256xf32, #tpu.memory_space<vmem>>, %arg5: memref<1x1x8x128xf32, #tpu.memory_space<vmem>>, %arg6: memref<8x256xf32, #tpu.memory_space<vmem>>, %arg7: memref<8x256xf32, #tpu.memory_space<vmem>>, %arg8: memref<1x256xf32, #tpu.memory_space<vmem>>, %arg9: memref<1x256xf32, #tpu.memory_space<vmem>>, %arg10: memref<1x256xf32, #tpu.memory_space<vmem>>, %arg11: memref<1x256xf32, #tpu.memory_space<vmem>>) attributes {dimension_semantics = [#tpu.dimension_semantics<parallel>, #tpu.dimension_semantics<parallel>, #tpu.dimension_semantics<arbitrary>], iteration_bounds = array<i64: 2, 1, 1>, scalar_prefetch = 0 : i64, scratch_operands = 6 : i64, tpu.core_type = #tpu.core_type<tc>, window_params = [{transform_indices = @transform_0, window_bounds = array<i64: 1, 8, 256>}, {transform_indices = @transform_1, window_bounds = array<i64: 1, 8, 256>}, {transform_indices = @transform_2, window_bounds = array<i64: 1, 1, 8, 128>}]} {
    %c0_i32 = arith.constant 0 : i32
    %0 = arith.cmpi eq, %arg2, %c0_i32 : i32
    %1 = arith.extui %0 : i1 to i32
    %c0_i32_0 = arith.constant 0 : i32
    %2 = arith.cmpi ne, %1, %c0_i32_0 : i32
    scf.if %2 {
      %cst_56 = arith.constant 0.000000e+00 : f32
      %103 = vector.broadcast %cst_56 : f32 to vector<8x256xf32>
      %c0_57 = arith.constant 0 : index
      %c0_58 = arith.constant 0 : index
      %104 = vector.load %arg6[%c0_57, %c0_58] : memref<8x256xf32, #tpu.memory_space<vmem>>, vector<8x256xf32>
      tpu.vector_store %arg6[%c0_57, %c0_58], %103 {strides = array<i32>} : memref<8x256xf32, #tpu.memory_space<vmem>>, vector<8x256xf32>,
      %cst_59 = arith.constant 0.000000e+00 : f32
      %105 = vector.broadcast %cst_59 : f32 to vector<8x256xf32>
      %c0_60 = arith.constant 0 : index
      %c0_61 = arith.constant 0 : index
      %106 = vector.load %arg7[%c0_60, %c0_61] : memref<8x256xf32, #tpu.memory_space<vmem>>, vector<8x256xf32>
      tpu.vector_store %arg7[%c0_60, %c0_61], %105 {strides = array<i32>} : memref<8x256xf32, #tpu.memory_space<vmem>>, vector<8x256xf32>,
      %cst_62 = arith.constant 0.000000e+00 : f32
      %107 = vector.broadcast %cst_62 : f32 to vector<1x256xf32>
      %c0_63 = arith.constant 0 : index
      %c0_64 = arith.constant 0 : index
      %108 = vector.load %arg8[%c0_63, %c0_64] : memref<1x256xf32, #tpu.memory_space<vmem>>, vector<1x256xf32>
      tpu.vector_store %arg8[%c0_63, %c0_64], %107 {strides = array<i32>} : memref<1x256xf32, #tpu.memory_space<vmem>>, vector<1x256xf32>,
      %cst_65 = arith.constant 0.000000e+00 : f32
      %109 = vector.broadcast %cst_65 : f32 to vector<1x256xf32>
      %c0_66 = arith.constant 0 : index
      %c0_67 = arith.constant 0 : index
      %110 = vector.load %arg9[%c0_66, %c0_67] : memref<1x256xf32, #tpu.memory_space<vmem>>, vector<1x256xf32>
      tpu.vector_store %arg9[%c0_66, %c0_67], %109 {strides = array<i32>} : memref<1x256xf32, #tpu.memory_space<vmem>>, vector<1x256xf32>,
      %cst_68 = arith.constant 0.000000e+00 : f32
      %111 = vector.broadcast %cst_68 : f32 to vector<1x256xf32>
      %c0_69 = arith.constant 0 : index
      %c0_70 = arith.constant 0 : index
      %112 = vector.load %arg10[%c0_69, %c0_70] : memref<1x256xf32, #tpu.memory_space<vmem>>, vector<1x256xf32>
      tpu.vector_store %arg10[%c0_69, %c0_70], %111 {strides = array<i32>} : memref<1x256xf32, #tpu.memory_space<vmem>>, vector<1x256xf32>,
      %cst_71 = arith.constant 0.000000e+00 : f32
      %113 = vector.broadcast %cst_71 : f32 to vector<1x256xf32>
      %c0_72 = arith.constant 0 : index
      %c0_73 = arith.constant 0 : index
      %114 = vector.load %arg11[%c0_72, %c0_73] : memref<1x256xf32, #tpu.memory_space<vmem>>, vector<1x256xf32>
      tpu.vector_store %arg11[%c0_72, %c0_73], %113 {strides = array<i32>} : memref<1x256xf32, #tpu.memory_space<vmem>>, vector<1x256xf32>,
    } else {
    }
    %c0 = arith.constant 0 : index
    %c0_1 = arith.constant 0 : index
    %c0_2 = arith.constant 0 : index
    %3 = vector.load %arg3[%c0, %c0_1, %c0_2] : memref<1x8x256xf32, #tpu.memory_space<vmem>>, vector<1x8x256xf32>
    %4 = vector.shape_cast %3 : vector<1x8x256xf32> to vector<8x256xf32>
    %c0_3 = arith.constant 0 : index
    %c0_4 = arith.constant 0 : index
    %c0_5 = arith.constant 0 : index
    %5 = vector.load %arg4[%c0_3, %c0_4, %c0_5] : memref<1x8x256xf32, #tpu.memory_space<vmem>>, vector<1x8x256xf32>
    %6 = vector.shape_cast %5 : vector<1x8x256xf32> to vector<8x256xf32>
    %7 = tpu.iota {dimensions = array<i32: 0>} : vector<8x1xi32>
    %c4_i32 = arith.constant 4 : i32
    %8 = vector.broadcast %c4_i32 : i32 to vector<8x1xi32>
    %9 = arith.cmpi slt, %7, %8 : vector<8x1xi32>
    %10 = vector.shape_cast %9 : vector<8x1xi1> to vector<8x1xi1>
    %11 = vector.broadcast %10 : vector<8x1xi1> to vector<8x256xi1>
    %c4_i32_6 = arith.constant 4 : i32
    %12 = vector.broadcast %c4_i32_6 : i32 to vector<8x1xi32>
    %13 = arith.cmpi sge, %7, %12 : vector<8x1xi32>
    %c6_i32 = arith.constant 6 : i32
    %14 = vector.broadcast %c6_i32 : i32 to vector<8x1xi32>
    %15 = arith.cmpi slt, %7, %14 : vector<8x1xi32>
    %16 = arith.andi %13, %15 : vector<8x1xi1>
    %17 = vector.shape_cast %16 : vector<8x1xi1> to vector<8x1xi1>
    %18 = vector.broadcast %17 : vector<8x1xi1> to vector<8x256xi1>
    %c6_i32_7 = arith.constant 6 : i32
    %19 = vector.broadcast %c6_i32_7 : i32 to vector<8x1xi32>
    %20 = arith.cmpi sge, %7, %19 : vector<8x1xi32>
    %c8_i32 = arith.constant 8 : i32
    %21 = vector.broadcast %c8_i32 : i32 to vector<8x1xi32>
    %22 = arith.cmpi slt, %7, %21 : vector<8x1xi32>
    %23 = arith.andi %20, %22 : vector<8x1xi1>
    %24 = vector.shape_cast %23 : vector<8x1xi1> to vector<8x1xi1>
    %25 = vector.broadcast %24 : vector<8x1xi1> to vector<8x256xi1>
    %cst = arith.constant 1.000000e+00 : f32
    %26 = vector.broadcast %cst : f32 to vector<8x256xf32>
    %27 = arith.cmpf oeq, %6, %26 : vector<8x256xf32>
    %28 = arith.andi %27, %11 : vector<8x256xi1>
    %cst_8 = arith.constant 1.000000e+00 : f32
    %29 = vector.broadcast %cst_8 : f32 to vector<8x256xf32>
    %30 = arith.subf %29, %4 : vector<8x256xf32>
    %31 = arith.select %28, %4, %30 : vector<8x256xi1>, vector<8x256xf32>
    %cst_9 = arith.constant 9.99999974E-6 : f32
    %32 = vector.broadcast %cst_9 : f32 to vector<8x256xf32>
    %33 = arith.addf %31, %32 : vector<8x256xf32>
    %34 = math.log %33 : vector<8x256xf32>
    %35 = arith.mulf %30, %30 : vector<8x256xf32>
    %cst_10 = arith.constant 1.000000e+00 : f32
    %36 = vector.broadcast %cst_10 : f32 to vector<8x256xf32>
    %37 = arith.subf %36, %6 : vector<8x256xf32>
    %38 = arith.mulf %37, %37 : vector<8x256xf32>
    %39 = arith.mulf %38, %38 : vector<8x256xf32>
    %40 = arith.mulf %4, %4 : vector<8x256xf32>
    %41 = arith.mulf %39, %40 : vector<8x256xf32>
    %42 = arith.select %28, %35, %41 : vector<8x256xi1>, vector<8x256xf32>
    %c0_11 = arith.constant 0 : index
    %c0_12 = arith.constant 0 : index
    %43 = vector.load %arg7[%c0_11, %c0_12] : memref<8x256xf32, #tpu.memory_space<vmem>>, vector<8x256xf32>
    %44 = arith.mulf %42, %34 : vector<8x256xf32>
    %cst_13 = arith.constant 0.000000e+00 : f32
    %45 = vector.broadcast %cst_13 : f32 to vector<8x256xf32>
    %46 = arith.select %11, %44, %45 : vector<8x256xi1>, vector<8x256xf32>
    %47 = arith.addf %43, %46 : vector<8x256xf32>
    %c0_14 = arith.constant 0 : index
    %c0_15 = arith.constant 0 : index
    %48 = vector.load %arg7[%c0_14, %c0_15] : memref<8x256xf32, #tpu.memory_space<vmem>>, vector<8x256xf32>
    tpu.vector_store %arg7[%c0_14, %c0_15], %47 {strides = array<i32>} : memref<8x256xf32, #tpu.memory_space<vmem>>, vector<8x256xf32>,
    %c0_16 = arith.constant 0 : index
    %c0_17 = arith.constant 0 : index
    %49 = vector.load %arg6[%c0_16, %c0_17] : memref<8x256xf32, #tpu.memory_space<vmem>>, vector<8x256xf32>
    %cst_18 = arith.constant 1.000000e+00 : f32
    %cst_19 = arith.constant 0.000000e+00 : f32
    %50 = vector.broadcast %cst_18 : f32 to vector<8x256xf32>
    %51 = vector.broadcast %cst_19 : f32 to vector<8x256xf32>
    %52 = arith.select %28, %50, %51 : vector<8x256xi1>, vector<8x256xf32>
    %53 = arith.addf %49, %52 : vector<8x256xf32>
    %c0_20 = arith.constant 0 : index
    %c0_21 = arith.constant 0 : index
    %54 = vector.load %arg6[%c0_20, %c0_21] : memref<8x256xf32, #tpu.memory_space<vmem>>, vector<8x256xf32>
    tpu.vector_store %arg6[%c0_20, %c0_21], %53 {strides = array<i32>} : memref<8x256xf32, #tpu.memory_space<vmem>>, vector<8x256xf32>,
    %55 = arith.subf %4, %6 : vector<8x256xf32>
    %56 = math.absf %55 : vector<8x256xf32>
    %57 = math.absf %6 : vector<8x256xf32>
    %cst_22 = arith.constant 0.000000e+00 : f32
    %58 = vector.broadcast %cst_22 : f32 to vector<8x256xf32>
    %59 = arith.select %18, %57, %58 : vector<8x256xi1>, vector<8x256xf32>
    %cst_23 = arith.constant dense<0.000000e+00> : vector<256xf32>
    %60 = vector.multi_reduction <add>, %59, %cst_23 [0] : vector<8x256xf32> to vector<256xf32>
    %61 = vector.shape_cast %60 : vector<256xf32> to vector<1x256xf32>
    %cst_24 = arith.constant 0.000000e+00 : f32
    %62 = vector.broadcast %cst_24 : f32 to vector<8x256xf32>
    %63 = arith.select %18, %56, %62 : vector<8x256xi1>, vector<8x256xf32>
    %cst_25 = arith.constant dense<0.000000e+00> : vector<256xf32>
    %64 = vector.multi_reduction <add>, %63, %cst_25 [0] : vector<8x256xf32> to vector<256xf32>
    %65 = vector.shape_cast %64 : vector<256xf32> to vector<1x256xf32>
    %cst_26 = arith.constant 0.000000e+00 : f32
    %66 = vector.broadcast %cst_26 : f32 to vector<1x256xf32>
    %67 = arith.cmpf one, %61, %66 : vector<1x256xf32>
    %c0_27 = arith.constant 0 : index
    %c0_28 = arith.constant 0 : index
    %68 = vector.load %arg8[%c0_27, %c0_28] : memref<1x256xf32, #tpu.memory_space<vmem>>, vector<1x256xf32>
    %cst_29 = arith.constant 1.000000e+00 : f32
    %cst_30 = arith.constant 0.000000e+00 : f32
    %69 = vector.broadcast %cst_29 : f32 to vector<1x256xf32>
    %70 = vector.broadcast %cst_30 : f32 to vector<1x256xf32>
    %71 = arith.select %67, %69, %70 : vector<1x256xi1>, vector<1x256xf32>
    %72 = arith.addf %68, %71 : vector<1x256xf32>
    %c0_31 = arith.constant 0 : index
    %c0_32 = arith.constant 0 : index
    %73 = vector.load %arg8[%c0_31, %c0_32] : memref<1x256xf32, #tpu.memory_space<vmem>>, vector<1x256xf32>
    tpu.vector_store %arg8[%c0_31, %c0_32], %72 {strides = array<i32>} : memref<1x256xf32, #tpu.memory_space<vmem>>, vector<1x256xf32>,
    %c0_33 = arith.constant 0 : index
    %c0_34 = arith.constant 0 : index
    %74 = vector.load %arg9[%c0_33, %c0_34] : memref<1x256xf32, #tpu.memory_space<vmem>>, vector<1x256xf32>
    %cst_35 = arith.constant 0.000000e+00 : f32
    %75 = vector.broadcast %cst_35 : f32 to vector<1x256xf32>
    %76 = arith.select %67, %65, %75 : vector<1x256xi1>, vector<1x256xf32>
    %77 = arith.addf %74, %76 : vector<1x256xf32>
    %c0_36 = arith.constant 0 : index
    %c0_37 = arith.constant 0 : index
    %78 = vector.load %arg9[%c0_36, %c0_37] : memref<1x256xf32, #tpu.memory_space<vmem>>, vector<1x256xf32>
    tpu.vector_store %arg9[%c0_36, %c0_37], %77 {strides = array<i32>} : memref<1x256xf32, #tpu.memory_space<vmem>>, vector<1x256xf32>,
    %cst_38 = arith.constant 0.000000e+00 : f32
    %79 = vector.broadcast %cst_38 : f32 to vector<8x256xf32>
    %80 = arith.select %25, %57, %79 : vector<8x256xi1>, vector<8x256xf32>
    %cst_39 = arith.constant dense<0.000000e+00> : vector<256xf32>
    %81 = vector.multi_reduction <add>, %80, %cst_39 [0] : vector<8x256xf32> to vector<256xf32>
    %82 = vector.shape_cast %81 : vector<256xf32> to vector<1x256xf32>
    %cst_40 = arith.constant 0.000000e+00 : f32
    %83 = vector.broadcast %cst_40 : f32 to vector<8x256xf32>
    %84 = arith.select %25, %56, %83 : vector<8x256xi1>, vector<8x256xf32>
    %cst_41 = arith.constant dense<0.000000e+00> : vector<256xf32>
    %85 = vector.multi_reduction <add>, %84, %cst_41 [0] : vector<8x256xf32> to vector<256xf32>
    %86 = vector.shape_cast %85 : vector<256xf32> to vector<1x256xf32>
    %cst_42 = arith.constant 0.000000e+00 : f32
    %87 = vector.broadcast %cst_42 : f32 to vector<1x256xf32>
    %88 = arith.cmpf one, %82, %87 : vector<1x256xf32>
    %c0_43 = arith.constant 0 : index
    %c0_44 = arith.constant 0 : index
    %89 = vector.load %arg10[%c0_43, %c0_44] : memref<1x256xf32, #tpu.memory_space<vmem>>, vector<1x256xf32>
    %cst_45 = arith.constant 1.000000e+00 : f32
    %cst_46 = arith.constant 0.000000e+00 : f32
    %90 = vector.broadcast %cst_45 : f32 to vector<1x256xf32>
    %91 = vector.broadcast %cst_46 : f32 to vector<1x256xf32>
    %92 = arith.select %88, %90, %91 : vector<1x256xi1>, vector<1x256xf32>
    %93 = arith.addf %89, %92 : vector<1x256xf32>
    %c0_47 = arith.constant 0 : index
    %c0_48 = arith.constant 0 : index
    %94 = vector.load %arg10[%c0_47, %c0_48] : memref<1x256xf32, #tpu.memory_space<vmem>>, vector<1x256xf32>
    tpu.vector_store %arg10[%c0_47, %c0_48], %93 {strides = array<i32>} : memref<1x256xf32, #tpu.memory_space<vmem>>, vector<1x256xf32>,
    %c0_49 = arith.constant 0 : index
    %c0_50 = arith.constant 0 : index
    %95 = vector.load %arg11[%c0_49, %c0_50] : memref<1x256xf32, #tpu.memory_space<vmem>>, vector<1x256xf32>
    %cst_51 = arith.constant 0.000000e+00 : f32
    %96 = vector.broadcast %cst_51 : f32 to vector<1x256xf32>
    %97 = arith.select %88, %86, %96 : vector<1x256xi1>, vector<1x256xf32>
    %98 = arith.addf %95, %97 : vector<1x256xf32>
    %c0_52 = arith.constant 0 : index
    %c0_53 = arith.constant 0 : index
    %99 = vector.load %arg11[%c0_52, %c0_53] : memref<1x256xf32, #tpu.memory_space<vmem>>, vector<1x256xf32>
    tpu.vector_store %arg11[%c0_52, %c0_53], %98 {strides = array<i32>} : memref<1x256xf32, #tpu.memory_space<vmem>>, vector<1x256xf32>,
    %c0_i32_54 = arith.constant 0 : i32
    %100 = arith.cmpi eq, %arg2, %c0_i32_54 : i32
    %101 = arith.extui %100 : i1 to i32
    %c0_i32_55 = arith.constant 0 : i32
    %102 = arith.cmpi ne, %101, %c0_i32_55 : i32
    scf.if %102 {
      %c0_56 = arith.constant 0 : index
      %c0_57 = arith.constant 0 : index
      %103 = vector.load %arg6[%c0_56, %c0_57] : memref<8x256xf32, #tpu.memory_space<vmem>>, vector<8x256xf32>
      %104 = vector.shape_cast %103 : vector<8x256xf32> to vector<1x8x256xf32>
      %cst_58 = arith.constant dense<0.000000e+00> : vector<1xf32>
      %105 = vector.multi_reduction <add>, %104, %cst_58 [1, 2] : vector<1x8x256xf32> to vector<1xf32>
      %106 = vector.shape_cast %105 : vector<1xf32> to vector<1x1x1xf32>
      %107 = vector.extract %106[0, 0, 0] : f32 from vector<1x1x1xf32>
      %c0_59 = arith.constant 0 : index
      %c0_60 = arith.constant 0 : index
      %108 = vector.load %arg7[%c0_59, %c0_60] : memref<8x256xf32, #tpu.memory_space<vmem>>, vector<8x256xf32>
      %109 = vector.shape_cast %108 : vector<8x256xf32> to vector<1x8x256xf32>
      %cst_61 = arith.constant dense<0.000000e+00> : vector<1xf32>
      %110 = vector.multi_reduction <add>, %109, %cst_61 [1, 2] : vector<1x8x256xf32> to vector<1xf32>
      %111 = vector.shape_cast %110 : vector<1xf32> to vector<1x1x1xf32>
      %112 = vector.extract %111[0, 0, 0] : f32 from vector<1x1x1xf32>
      %c0_62 = arith.constant 0 : index
      %c0_63 = arith.constant 0 : index
      %113 = vector.load %arg8[%c0_62, %c0_63] : memref<1x256xf32, #tpu.memory_space<vmem>>, vector<1x256xf32>
      %114 = vector.shape_cast %113 : vector<1x256xf32> to vector<1x1x256xf32>
      %cst_64 = arith.constant dense<0.000000e+00> : vector<1xf32>
      %115 = vector.multi_reduction <add>, %114, %cst_64 [1, 2] : vector<1x1x256xf32> to vector<1xf32>
      %116 = vector.shape_cast %115 : vector<1xf32> to vector<1x1x1xf32>
      %117 = vector.extract %116[0, 0, 0] : f32 from vector<1x1x1xf32>
      %c0_65 = arith.constant 0 : index
      %c0_66 = arith.constant 0 : index
      %118 = vector.load %arg9[%c0_65, %c0_66] : memref<1x256xf32, #tpu.memory_space<vmem>>, vector<1x256xf32>
      %119 = vector.shape_cast %118 : vector<1x256xf32> to vector<1x1x256xf32>
      %cst_67 = arith.constant dense<0.000000e+00> : vector<1xf32>
      %120 = vector.multi_reduction <add>, %119, %cst_67 [1, 2] : vector<1x1x256xf32> to vector<1xf32>
      %121 = vector.shape_cast %120 : vector<1xf32> to vector<1x1x1xf32>
      %122 = vector.extract %121[0, 0, 0] : f32 from vector<1x1x1xf32>
      %c0_68 = arith.constant 0 : index
      %c0_69 = arith.constant 0 : index
      %123 = vector.load %arg10[%c0_68, %c0_69] : memref<1x256xf32, #tpu.memory_space<vmem>>, vector<1x256xf32>
      %124 = vector.shape_cast %123 : vector<1x256xf32> to vector<1x1x256xf32>
      %cst_70 = arith.constant dense<0.000000e+00> : vector<1xf32>
      %125 = vector.multi_reduction <add>, %124, %cst_70 [1, 2] : vector<1x1x256xf32> to vector<1xf32>
      %126 = vector.shape_cast %125 : vector<1xf32> to vector<1x1x1xf32>
      %127 = vector.extract %126[0, 0, 0] : f32 from vector<1x1x1xf32>
      %c0_71 = arith.constant 0 : index
      %c0_72 = arith.constant 0 : index
      %128 = vector.load %arg11[%c0_71, %c0_72] : memref<1x256xf32, #tpu.memory_space<vmem>>, vector<1x256xf32>
      %129 = vector.shape_cast %128 : vector<1x256xf32> to vector<1x1x256xf32>
      %cst_73 = arith.constant dense<0.000000e+00> : vector<1xf32>
      %130 = vector.multi_reduction <add>, %129, %cst_73 [1, 2] : vector<1x1x256xf32> to vector<1xf32>
      %131 = vector.shape_cast %130 : vector<1xf32> to vector<1x1x1xf32>
      %132 = vector.extract %131[0, 0, 0] : f32 from vector<1x1x1xf32>
      %133 = tpu.iota {dimensions = array<i32: 2>} : vector<1x1x8x128xi32>
      %c0_i32_74 = arith.constant 0 : i32
      %134 = vector.broadcast %c0_i32_74 : i32 to vector<1x1x8x128xi32>
      %135 = arith.cmpi eq, %133, %134 : vector<1x1x8x128xi32>
      %c1_i32 = arith.constant 1 : i32
      %136 = vector.broadcast %c1_i32 : i32 to vector<1x1x8x128xi32>
      %137 = arith.cmpi eq, %133, %136 : vector<1x1x8x128xi32>
      %c2_i32 = arith.constant 2 : i32
      %138 = vector.broadcast %c2_i32 : i32 to vector<1x1x8x128xi32>
      %139 = arith.cmpi eq, %133, %138 : vector<1x1x8x128xi32>
      %c3_i32 = arith.constant 3 : i32
      %140 = vector.broadcast %c3_i32 : i32 to vector<1x1x8x128xi32>
      %141 = arith.cmpi eq, %133, %140 : vector<1x1x8x128xi32>
      %c4_i32_75 = arith.constant 4 : i32
      %142 = vector.broadcast %c4_i32_75 : i32 to vector<1x1x8x128xi32>
      %143 = arith.cmpi eq, %133, %142 : vector<1x1x8x128xi32>
      %144 = vector.broadcast %127 : f32 to vector<1x1x8x128xf32>
      %145 = vector.broadcast %132 : f32 to vector<1x1x8x128xf32>
      %146 = arith.select %143, %144, %145 : vector<1x1x8x128xi1>, vector<1x1x8x128xf32>
      %147 = vector.broadcast %122 : f32 to vector<1x1x8x128xf32>
      %148 = arith.select %141, %147, %146 : vector<1x1x8x128xi1>, vector<1x1x8x128xf32>
      %149 = vector.broadcast %117 : f32 to vector<1x1x8x128xf32>
      %150 = arith.select %139, %149, %148 : vector<1x1x8x128xi1>, vector<1x1x8x128xf32>
      %151 = vector.broadcast %112 : f32 to vector<1x1x8x128xf32>
      %152 = arith.select %137, %151, %150 : vector<1x1x8x128xi1>, vector<1x1x8x128xf32>
      %153 = vector.broadcast %107 : f32 to vector<1x1x8x128xf32>
      %154 = arith.select %135, %153, %152 : vector<1x1x8x128xi1>, vector<1x1x8x128xf32>
      %c0_76 = arith.constant 0 : index
      %c0_77 = arith.constant 0 : index
      %c0_78 = arith.constant 0 : index
      %c0_79 = arith.constant 0 : index
      %155 = vector.load %arg5[%c0_76, %c0_77, %c0_78, %c0_79] : memref<1x1x8x128xf32, #tpu.memory_space<vmem>>, vector<1x1x8x128xf32>
      tpu.vector_store %arg5[%c0_76, %c0_77, %c0_78, %c0_79], %154 {strides = array<i32>} : memref<1x1x8x128xf32, #tpu.memory_space<vmem>>, vector<1x1x8x128xf32>,
    } else {
    }
    return
  }
  func.func @transform_0(%arg0: i32, %arg1: i32, %arg2: i32) -> (i32, i32, i32) {
    %c1_i32 = arith.constant 1 : i32
    %0 = arith.muli %arg1, %c1_i32 : i32
    %1 = arith.addi %0, %arg2 : i32
    %c0_i32 = arith.constant 0 : i32
    %c0_i32_0 = arith.constant 0 : i32
    return %arg0, %c0_i32, %1 : i32, i32, i32
  }
  func.func @transform_1(%arg0: i32, %arg1: i32, %arg2: i32) -> (i32, i32, i32) {
    %c1_i32 = arith.constant 1 : i32
    %0 = arith.muli %arg1, %c1_i32 : i32
    %1 = arith.addi %0, %arg2 : i32
    %c0_i32 = arith.constant 0 : i32
    %c0_i32_0 = arith.constant 0 : i32
    return %arg0, %c0_i32, %1 : i32, i32, i32
  }
  func.func @transform_2(%arg0: i32, %arg1: i32, %arg2: i32) -> (i32, i32, i32, i32) {
    %c0_i32 = arith.constant 0 : i32
    %c0_i32_0 = arith.constant 0 : i32
    %c0_i32_1 = arith.constant 0 : i32
    return %arg0, %arg1, %c0_i32, %c0_i32_0 : i32, i32, i32, i32
  }
}

</mosaic_0001>

<llo_original>
// kernel: tpu_custom_call.1
$region0: #{tpu_custom_call.1}
  #allocation0 [shape = 'u32[]', space=smem, size = 0x4, offset = 0x4, fixed_abs, tag = 'smem constant byte address 0x4 - core index']
  #allocation1 [shape = 'u32[144,128]{1,0:T(1,128)}', space=vmem, size = 0x12000, scoped, tag = 'internal scratch']
  #allocation2 [shape = 'f32[8,256]{1,0:T(8,128)}', space=vmem, size = 0x2000, scoped, tag = 'scratch operand']
  #allocation3 [shape = 'f32[8,256]{1,0:T(8,128)}', space=vmem, size = 0x2000, scoped, tag = 'scratch operand']
  #allocation4 [shape = 'f32[1,256]{1,0:T(1,128)}', space=vmem, size = 0x400, scoped, tag = 'scratch operand']
  #allocation5 [shape = 'f32[1,256]{1,0:T(1,128)}', space=vmem, size = 0x400, scoped, tag = 'scratch operand']
  #allocation6 [shape = 'f32[1,256]{1,0:T(1,128)}', space=vmem, size = 0x400, scoped, tag = 'scratch operand']
  #allocation7 [shape = 'f32[1,256]{1,0:T(1,128)}', space=vmem, size = 0x400, scoped, tag = 'scratch operand']
  %s0 = inlined_call_operand.hbm [shape: f32[2,8,256], index: 0, kind: input, shape index: {}]
  %s1 = inlined_call_operand.hbm [shape: f32[2,8,256], index: 1, kind: input, shape index: {}]
  %s2 = inlined_call_operand.hbm [shape: f32[2,1,8,128], index: 2, kind: output, shape index: {}]
  %s3 = sld [smem:[#allocation0]]
  $region57: #{tpu_custom_call.1} parent=0
    _
  %s5 = ssub.s32 1, %s3
  %s6 = scalar_select 0, %s5, %s3
  $region1: #{tpu_custom_call.1} parent=0
    #allocation8 [shape = 'u8[16384]{0}', space=vmem, size = 0x4000, scoped, tag = 'input window, operand 0']
    #allocation9 [shape = 's32[2]{0}', space=sflag, size = 0x8, scoped, tag = 'scoped memory for tpu_custom_call.1']
    #allocation10 [shape = 's32[2]{0}', space=sflag, size = 0x8, scoped, tag = 'scoped memory for tpu_custom_call.1']
    #allocation11 [shape = 'u8[16384]{0}', space=vmem, size = 0x4000, scoped, tag = 'input window, operand 1']
    #allocation12 [shape = 's32[2]{0}', space=sflag, size = 0x8, scoped, tag = 'scoped memory for tpu_custom_call.1']
    #allocation13 [shape = 'u8[8192]{0}', space=vmem, size = 0x2000, scoped, tag = 'output window, operand 0']
    %7 = vsyncpa [#allocation9], 0
    %s8 = scalar_lea.sflag [#allocation9], 1
    %9 = vsyncpa %s8, 0
    %10 = vsyncpa [#allocation12], 0
    %s11 = scalar_lea.sflag [#allocation12], 1
    %12 = vsyncpa %s11, 0
    %13 = vsyncpa [#allocation10], 0
    %s14 = scalar_lea.sflag [#allocation10], 1
    %15 = vsyncpa %s14, 0
    loop: start=0, step=1, limit=4
    $region2: #{tpu_custom_call.1} parent=1 // loop_pre_header
      _
    $region3: #{tpu_custom_call.1} parent=1 // loop_header
      %s17 = sphi 0, %s21
      %p18 = scmp.ge.s32.totalorder %s17, 4
      %s24 = sphi 0, %s43
      %s25 = sphi 0, %s39
      %s26 = sphi 0, %s35
      %s27 = sphi 0, %s24
      %s28 = sphi 0, %s25
      %s29 = sphi 0, %s26
      %s30 = sphi 0, %s27
      %s31 = sphi 0, %s28
      %s32 = sphi 0, %s29
      %s50 = sphi 0, %s52
      %s53 = sphi 0, %s50
      %s54 = sphi 0, %s53
      %s70 = sphi 0, %s54
      %s80 = sphi 0, %s82
      %s83 = sphi 0, %s80
      %s84 = sphi 0, %s83
      %s100 = sphi 0, %s84
      %s108 = sphi 0, %s110
      %s111 = sphi 0, %s108
      %s112 = sphi 0, %s111
      %s128 = sphi 0, %s112
    $region4: #{tpu_custom_call.1} parent=1 // loop_header_branch
      %20 = sbr.rel (%p18) target = $region8
    $region5: #{tpu_custom_call.1} parent=1 // loop_body
      %s22 = ssub.s32 %s17, 1
      %s23 = ssub.s32 %s17, 2
      %s33 = sadd.s32 1, %s26
      %p34 = scmp.ge.s32.totalorder %s33, 1
      %s35 = scalar_select %p34, 0, %s33
      %s36 = sadd.s32 1, %s25
      %s37 = scalar_select %p34, %s36, %s25
      %p38 = scmp.ge.s32.totalorder %s37, 1
      %s39 = scalar_select %p38, 0, %s37
      %s40 = sadd.s32 1, %s24
      %s41 = scalar_select %p38, %s40, %s24
      %p42 = scmp.ge.s32.totalorder %s41, 2
      %s43 = scalar_select %p42, 0, %s41
      %s44 = sadd.s32 %s25, %s26
      %s45 = sadd.s32 %s39, %s35
      %s46 = ssub.s32 %s24, %s43
      %s47 = ssub.s32 %s44, %s45
      %s48 = sor.u32 %s46, %s47
      %p49 = scmp.eq.s32.totalorder %s48, 0
      %s51 = sadd.s32 %s50, 1
      %s52 = scalar_select %p49, %s50, %s51
      %p55 = pneg %p49
      %p56 = scmp.eq.s32.totalorder %s17, 1
      %p57 = por %p55, %p56
      %p58 = scmp.ne.s32.totalorder %s50, %s53
      %p59 = scmp.eq.s32.totalorder %s17, 0
      %p60 = por %p58, %p59
      %p61 = scmp.ne.s32.totalorder %s50, %s53
      %p62 = scmp.eq.s32.totalorder %s22, 1
      %p63 = por %p61, %p62
      %p64 = scmp.ne.s32.totalorder %s53, %s54
      %p65 = scmp.eq.s32.totalorder %s22, 0
      %p66 = por %p64, %p65
      %p67 = scmp.ne.s32.totalorder %s53, %s54
      %p68 = scmp.eq.s32.totalorder %s23, 1
      %p69 = por %p67, %p68
      %p71 = scmp.ne.s32.totalorder %s54, %s70
      %p72 = scmp.eq.s32.totalorder %s23, 0
      %p73 = por %p71, %p72
      %s74 = sadd.s32 %s25, %s26
      %s75 = sadd.s32 %s39, %s35
      %s76 = ssub.s32 %s24, %s43
      %s77 = ssub.s32 %s74, %s75
      %s78 = sor.u32 %s76, %s77
      %p79 = scmp.eq.s32.totalorder %s78, 0
      %s81 = sadd.s32 %s80, 1
      %s82 = scalar_select %p79, %s80, %s81
      %p85 = pneg %p79
      %p86 = scmp.eq.s32.totalorder %s17, 1
      %p87 = por %p85, %p86
      %p88 = scmp.ne.s32.totalorder %s80, %s83
      %p89 = scmp.eq.s32.totalorder %s17, 0
      %p90 = por %p88, %p89
      %p91 = scmp.ne.s32.totalorder %s80, %s83
      %p92 = scmp.eq.s32.totalorder %s22, 1
      %p93 = por %p91, %p92
      %p94 = scmp.ne.s32.totalorder %s83, %s84
      %p95 = scmp.eq.s32.totalorder %s22, 0
      %p96 = por %p94, %p95
      %p97 = scmp.ne.s32.totalorder %s83, %s84
      %p98 = scmp.eq.s32.totalorder %s23, 1
      %p99 = por %p97, %p98
      %p101 = scmp.ne.s32.totalorder %s84, %s100
      %p102 = scmp.eq.s32.totalorder %s23, 0
      %p103 = por %p101, %p102
      %s104 = ssub.s32 %s24, %s43
      %s105 = ssub.s32 %s25, %s39
      %s106 = sor.u32 %s104, %s105
      %p107 = scmp.eq.s32.totalorder %s106, 0
      %s109 = sadd.s32 %s108, 1
      %s110 = scalar_select %p107, %s108, %s109
      %p113 = pneg %p107
      %p114 = scmp.eq.s32.totalorder %s17, 1
      %p115 = por %p113, %p114
      %p116 = scmp.ne.s32.totalorder %s108, %s111
      %p117 = scmp.eq.s32.totalorder %s17, 0
      %p118 = por %p116, %p117
      %p119 = scmp.ne.s32.totalorder %s108, %s111
      %p120 = scmp.eq.s32.totalorder %s22, 1
      %p121 = por %p119, %p120
      %p122 = scmp.ne.s32.totalorder %s111, %s112
      %p123 = scmp.eq.s32.totalorder %s22, 0
      %p124 = por %p122, %p123
      %p125 = scmp.ne.s32.totalorder %s111, %s112
      %p126 = scmp.eq.s32.totalorder %s23, 1
      %p127 = por %p125, %p126
      %p129 = scmp.ne.s32.totalorder %s112, %s128
      %p130 = scmp.eq.s32.totalorder %s23, 0
      %p131 = por %p129, %p130
      %p132 = scmp.le.s32.totalorder 1, %s17
      %p133 = scmp.lt.s32.totalorder %s17, 3
      %p134 = pnand %p132, %p133
      %p135 = pneg %p134
      // Predicated region
      $region9: #{tpu_custom_call.1} parent=5 // pred_check
        _
      $region10: #{tpu_custom_call.1} parent=5 // pred_check_branch
        %137 = sbr.rel (%p134) target = $region12
      $region11: #{tpu_custom_call.1} parent=5 // pred_region
        %s138 = ssub.s32 %s17, 1
      $region12: #{tpu_custom_call.1} parent=5 // pred_fallthru
        _
      %p139 = scmp.lt.s32.totalorder %s17, 2
      // Predicated region
      $region13: #{tpu_custom_call.1} parent=5 // pred_check
        %p140 = pneg %p139
      $region14: #{tpu_custom_call.1} parent=5 // pred_check_branch
        %142 = sbr.rel (%p140) target = $region16
      $region15: #{tpu_custom_call.1} parent=5 // pred_region
        // Predicated region
        $region17: #{tpu_custom_call.1} parent=15 // pred_check
          %p143 = pneg %p60
        $region18: #{tpu_custom_call.1} parent=15 // pred_check_branch
          %145 = sbr.rel (%p143) target = $region20
        $region19: #{tpu_custom_call.1} parent=15 // pred_region
          %s146 = sand.u32 %s50, 1
          %s147 = scalar_lea.sflag [#allocation9], %s146
          %s148 = sand.u32 %s50, 1
          %s149 = smul.addr %s148, 16
          %s150 = scalar_lea.vmem [#allocation8], %s149
          %s151 = sadd.s32 %s25, %s26
          %s152 = smul.u32 2, %s151
          %s154 = ssub.s32 256, 256
          %155 = vsyncadd %s147, %s154
          %s156 = smul.addr %s24, 2
          %s157 = sadd.s32 %s152, %s156
          %s158 = smul.addr %s157, 128
          %s159 = scalar_lea.hbm %s0, %s158
          %s161 = sshll.u32 %s150, 4
          %s162 = int_to_ptr.vmem [resolvable:$true] %s161
          %164 = dma.hbm_to_vmem [thread:$0]  %s159, 256, %s162, %s147
        $region20: #{tpu_custom_call.1} parent=15 // pred_fallthru
          _
        // Predicated region
        $region21: #{tpu_custom_call.1} parent=15 // pred_check
          %p165 = pneg %p90
        $region22: #{tpu_custom_call.1} parent=15 // pred_check_branch
          %167 = sbr.rel (%p165) target = $region24
        $region23: #{tpu_custom_call.1} parent=15 // pred_region
          %s168 = sand.u32 %s80, 1
          %s169 = scalar_lea.sflag [#allocation12], %s168
          %s170 = sand.u32 %s80, 1
          %s171 = smul.addr %s170, 16
          %s172 = scalar_lea.vmem [#allocation11], %s171
          %s173 = sadd.s32 %s25, %s26
          %s174 = smul.u32 2, %s173
          %s176 = ssub.s32 256, 256
          %177 = vsyncadd %s169, %s176
          %s178 = smul.addr %s24, 2
          %s179 = sadd.s32 %s174, %s178
          %s180 = smul.addr %s179, 128
          %s181 = scalar_lea.hbm %s1, %s180
          %s183 = sshll.u32 %s172, 4
          %s184 = int_to_ptr.vmem [resolvable:$true] %s183
          %186 = dma.hbm_to_vmem [thread:$0]  %s181, 256, %s184, %s169
        $region24: #{tpu_custom_call.1} parent=15 // pred_fallthru
          _
      $region16: #{tpu_custom_call.1} parent=5 // pred_fallthru
        _
      %p187 = scmp.le.s32.totalorder 1, %s17
      %p188 = scmp.lt.s32.totalorder %s17, 3
      %p189 = pnand %p187, %p188
      %p190 = pneg %p189
      // Predicated region
      $region25: #{tpu_custom_call.1} parent=5 // pred_check
        _
      $region26: #{tpu_custom_call.1} parent=5 // pred_check_branch
        %192 = sbr.rel (%p189) target = $region28
      $region27: #{tpu_custom_call.1} parent=5 // pred_region
        %s193 = ssub.s32 %s17, 1
        %s194 = sand.u32 %s53, 1
        %s195 = scalar_lea.sflag [#allocation9], %s194
        %s196 = sand.u32 %s53, 1
        %s197 = smul.addr %s196, 16
        %s198 = scalar_lea.vmem [#allocation8], %s197
        // Predicated region
        $region29: #{tpu_custom_call.1} parent=27 // pred_check
          %p199 = pneg %p66
        $region30: #{tpu_custom_call.1} parent=27 // pred_check_branch
          %201 = sbr.rel (%p199) target = $region32
        $region31: #{tpu_custom_call.1} parent=27 // pred_region
          %202 = dma.done %s195, 256
        $region32: #{tpu_custom_call.1} parent=27 // pred_fallthru
          _
        %s203 = sand.u32 %s83, 1
        %s204 = scalar_lea.sflag [#allocation12], %s203
        %s205 = sand.u32 %s83, 1
        %s206 = smul.addr %s205, 16
        %s207 = scalar_lea.vmem [#allocation11], %s206
        // Predicated region
        $region33: #{tpu_custom_call.1} parent=27 // pred_check
          %p208 = pneg %p96
        $region34: #{tpu_custom_call.1} parent=27 // pred_check_branch
          %210 = sbr.rel (%p208) target = $region36
        $region35: #{tpu_custom_call.1} parent=27 // pred_region
          %211 = dma.done %s204, 256
        $region36: #{tpu_custom_call.1} parent=27 // pred_fallthru
          _
        %s212 = sand.u32 %s53, 1
        %s213 = scalar_lea.sflag [#allocation9], %s212
        %s214 = sand.u32 %s53, 1
        %s215 = smul.addr %s214, 16
        %s216 = scalar_lea.vmem [#allocation8], %s215
        %p217 = pneg %p66
        %p218 = pneg %p63
        %s219 = sand.u32 %s83, 1
        %s220 = scalar_lea.sflag [#allocation12], %s219
        %s221 = sand.u32 %s83, 1
        %s222 = smul.addr %s221, 16
        %s223 = scalar_lea.vmem [#allocation11], %s222
        %p224 = pneg %p96
        %p225 = pneg %p93
        %p226 = pneg %p124
        %p227 = pneg %p121
        %s228 = sand.u32 %s111, 1
        %s229 = scalar_lea.sflag [#allocation10], %s228
        %s230 = sand.u32 %s111, 1
        %s231 = smul.addr %s230, 8
        %s232 = scalar_lea.vmem [#allocation13], %s231
        %s233 = sadd.s32 %s28, %s29
        %s234 = smul.u32 2, %s233
        %s235 = sadd.s32 %s28, %s29
        %s236 = smul.u32 2, %s235
        %p237 = scmp.eq.s32.totalorder %s29, 0
        // Predicated region
        $region37: #{tpu_custom_call.1} parent=27 // pred_check
          %p238 = pneg %p237
        $region38: #{tpu_custom_call.1} parent=27 // pred_check_branch
          %240 = sbr.rel (%p238) target = $region40
        $region39: #{tpu_custom_call.1} parent=27 // pred_region
          %241 = vst [vmem:[#allocation2] sm:$0xff] 0.0
          %242 = vst [vmem:[#allocation2 + $0x8] sm:$0xff] 0.0
          %243 = vst [vmem:[#allocation3] sm:$0xff] 0.0
          %244 = vst [vmem:[#allocation3 + $0x8] sm:$0xff] 0.0
          %v245 = vlaneseq
          %vm246 = vcmp.ge.s32.totalorder %v245, 0
          %vm247 = vcmp.lt.s32.totalorder %v245, 256
          %vm248 = vmand %vm246, %vm247
          %249 = vst.msk [vmem:[#allocation4] sm:$0x3] %vm248, 0.0
          %250 = vst.msk [vmem:[#allocation5] sm:$0x3] %vm248, 0.0
          %251 = vst.msk [vmem:[#allocation6] sm:$0x3] %vm248, 0.0
          %252 = vst.msk [vmem:[#allocation7] sm:$0x3] %vm248, 0.0
        $region40: #{tpu_custom_call.1} parent=27 // pred_fallthru
          _
        %v253 = vld [vmem:[%s198] sm:$0xff]
        %v254 = vld [vmem:[%s198 + $0x8] sm:$0xff]
        %v255 = vld [vmem:[%s207] sm:$0xff]
        %v256 = vld [vmem:[%s207 + $0x8] sm:$0xff]
        %v257 = vlaneseq
        %v258 = vshrl.u32 %v257, 7
        %vm259 = vcmp.lt.s32.totalorder %v258, 4
        %v260 = vsel %vm259, 1, 0
        %vm261 = vcmp.eq.s32.totalorder %v260, 1
        %vm262 = vcmp.ge.s32.totalorder %v258, 4
        %vm263 = vcmp.lt.s32.totalorder %v258, 6
        %vm264 = vmand %vm262, %vm263
        %v265 = vsel %vm264, 1, 0
        %vm266 = vcmp.eq.s32.totalorder %v265, 1
        %vm267 = vcmp.ge.s32.totalorder %v258, 6
        %vm268 = vcmp.lt.s32.totalorder %v258, 8
        %vm269 = vmand %vm267, %vm268
        %v270 = vsel %vm269, 1, 0
        %vm271 = vcmp.eq.s32.totalorder %v270, 1
        %vm272 = vcmp.eq.f32.partialorder %v255, 1.0
        %vm273 = vcmp.eq.f32.partialorder %v256, 1.0
        %vm274 = vmand %vm272, %vm261
        %vm275 = vmand %vm273, %vm261
        %v276 = vsub.f32 1.0, %v253
        %v277 = vsub.f32 1.0, %v254
        %v278 = vsel %vm274, %v253, %v276
        %v279 = vsel %vm275, %v254, %v277
        %v280 = vadd.f32 %v278, 1e-05
        %v281 = vadd.f32 %v279, 1e-05
        %v282 = vlog2.pop %v280
        %v283 = vmul.f32 %v282, 0.6931472
        %v284 = vlog2.pop %v281
        %v285 = vmul.f32 %v284, 0.6931472
        %v286 = vmul.f32 %v276, %v276
        %v287 = vmul.f32 %v277, %v277
        %v288 = vsub.f32 1.0, %v255
        %v289 = vsub.f32 1.0, %v256
        %v290 = vmul.f32 %v288, %v288
        %v291 = vmul.f32 %v289, %v289
        %v292 = vmul.f32 %v290, %v290
        %v293 = vmul.f32 %v291, %v291
        %v294 = vmul.f32 %v253, %v253
        %v295 = vmul.f32 %v254, %v254
        %v296 = vmul.f32 %v292, %v294
        %v297 = vmul.f32 %v293, %v295
        %v298 = vsel %vm274, %v286, %v296
        %v299 = vsel %vm275, %v287, %v297
        %v300 = vld [vmem:[#allocation3] sm:$0xff]
        %v301 = vld [vmem:[#allocation3 + $0x8] sm:$0xff]
        %v302 = vmul.f32 %v298, %v283
        %v303 = vmul.f32 %v299, %v285
        %v304 = vsel %vm261, %v302, 0.0
        %v305 = vsel %vm261, %v303, 0.0
        %v306 = vadd.f32 %v300, %v304
        %v307 = vadd.f32 %v301, %v305
        %308 = vst [vmem:[#allocation3] sm:$0xff] %v306
        %309 = vst [vmem:[#allocation3 + $0x8] sm:$0xff] %v307
        %v310 = vld [vmem:[#allocation2] sm:$0xff]
        %v311 = vld [vmem:[#allocation2 + $0x8] sm:$0xff]
        %v312 = vsel %vm274, 1.0, 0.0
        %v313 = vsel %vm275, 1.0, 0.0
        %v314 = vadd.f32 %v310, %v312
        %v315 = vadd.f32 %v311, %v313
        %316 = vst [vmem:[#allocation2] sm:$0xff] %v314
        %317 = vst [vmem:[#allocation2 + $0x8] sm:$0xff] %v315
        %v318 = vsub.f32 %v253, %v255
        %v319 = vsub.f32 %v254, %v256
        %v320 = vand.u32 2147483647, %v318
        %v321 = vand.u32 2147483647, %v319
        %v322 = vand.u32 2147483647, %v255
        %v323 = vand.u32 2147483647, %v256
        %v324 = vsel %vm266, %v322, 0.0
        %v325 = vsel %vm266, %v323, 0.0
        %v326 = vrot.slane %v324, 4
        %v327 = vadd.f32 %v324, %v326
        %v328 = vrot.slane %v327, 2
        %v329 = vadd.f32 %v327, %v328
        %v330 = vrot.slane %v329, 1
        %v331 = vadd.f32 %v329, %v330
        %v332 = vrot.slane %v325, 4
        %v333 = vadd.f32 %v325, %v332
        %v334 = vrot.slane %v333, 2
        %v335 = vadd.f32 %v333, %v334
        %v336 = vrot.slane %v335, 1
        %v337 = vadd.f32 %v335, %v336
        %v338 = vsel %vm266, %v320, 0.0
        %v339 = vsel %vm266, %v321, 0.0
        %v340 = vrot.slane %v338, 4
        %v341 = vadd.f32 %v338, %v340
        %v342 = vrot.slane %v341, 2
        %v343 = vadd.f32 %v341, %v342
        %v344 = vrot.slane %v343, 1
        %v345 = vadd.f32 %v343, %v344
        %v346 = vrot.slane %v339, 4
        %v347 = vadd.f32 %v339, %v346
        %v348 = vrot.slane %v347, 2
        %v349 = vadd.f32 %v347, %v348
        %v350 = vrot.slane %v349, 1
        %v351 = vadd.f32 %v349, %v350
        %vm352 = vcmp.ne.f32.partialorder %v331, 0.0
        %vm353 = vcmp.ne.f32.partialorder %v337, 0.0
        %v354 = vld [vmem:[#allocation4] sm:$0x3]
        %v355 = vsel %vm352, 1.0, 0.0
        %v356 = vsel %vm353, 1.0, 0.0
        %v359 = vcombine.low %v355, %v356
        %v361 = vunpack.c.l.s4 1966171168
        %v362 = vunpack.c.0.s8 %v361
        %v363 = vlaneseq
        %v364 = vshrl.u32 %v363, 7
        %v365 = vsub.s32 %v362, %v364
        %v366 = vrot.slane %v359, %v365
        %v368 = vunpack.c.l.s4 1966171168
        %v369 = vunpack.c.0.s8 %v368
        %v370 = vlaneseq
        %v371 = vshrl.u32 %v370, 7
        %v372 = vsub.s32 %v369, %v371
        %v373 = vrot.slane %v366, %v372
        %v375 = vadd.f32 %v354, %v373
        %v376 = vlaneseq
        %vm377 = vcmp.ge.s32.totalorder %v376, 0
        %vm378 = vcmp.lt.s32.totalorder %v376, 256
        %vm379 = vmand %vm377, %vm378
        %380 = vst.msk [vmem:[#allocation4] sm:$0x3] %vm379, %v375
        %v381 = vld [vmem:[#allocation5] sm:$0x3]
        %v382 = vsel %vm352, %v345, 0.0
        %v383 = vsel %vm353, %v351, 0.0
        %v386 = vcombine.low %v382, %v383
        %v388 = vunpack.c.l.s4 1966171168
        %v389 = vunpack.c.0.s8 %v388
        %v390 = vlaneseq
        %v391 = vshrl.u32 %v390, 7
        %v392 = vsub.s32 %v389, %v391
        %v393 = vrot.slane %v386, %v392
        %v395 = vunpack.c.l.s4 1966171168
        %v396 = vunpack.c.0.s8 %v395
        %v397 = vlaneseq
        %v398 = vshrl.u32 %v397, 7
        %v399 = vsub.s32 %v396, %v398
        %v400 = vrot.slane %v393, %v399
        %v402 = vadd.f32 %v381, %v400
        %403 = vst.msk [vmem:[#allocation5] sm:$0x3] %vm379, %v402
        %v404 = vsel %vm271, %v322, 0.0
        %v405 = vsel %vm271, %v323, 0.0
        %v406 = vrot.slane %v404, 4
        %v407 = vadd.f32 %v404, %v406
        %v408 = vrot.slane %v407, 2
        %v409 = vadd.f32 %v407, %v408
        %v410 = vrot.slane %v409, 1
        %v411 = vadd.f32 %v409, %v410
        %v412 = vrot.slane %v405, 4
        %v413 = vadd.f32 %v405, %v412
        %v414 = vrot.slane %v413, 2
        %v415 = vadd.f32 %v413, %v414
        %v416 = vrot.slane %v415, 1
        %v417 = vadd.f32 %v415, %v416
        %v418 = vsel %vm271, %v320, 0.0
        %v419 = vsel %vm271, %v321, 0.0
        %v420 = vrot.slane %v418, 4
        %v421 = vadd.f32 %v418, %v420
        %v422 = vrot.slane %v421, 2
        %v423 = vadd.f32 %v421, %v422
        %v424 = vrot.slane %v423, 1
        %v425 = vadd.f32 %v423, %v424
        %v426 = vrot.slane %v419, 4
        %v427 = vadd.f32 %v419, %v426
        %v428 = vrot.slane %v427, 2
        %v429 = vadd.f32 %v427, %v428
        %v430 = vrot.slane %v429, 1
        %v431 = vadd.f32 %v429, %v430
        %vm432 = vcmp.ne.f32.partialorder %v411, 0.0
        %vm433 = vcmp.ne.f32.partialorder %v417, 0.0
        %v434 = vld [vmem:[#allocation6] sm:$0x3]
        %v435 = vsel %vm432, 1.0, 0.0
        %v436 = vsel %vm433, 1.0, 0.0
        %v439 = vcombine.low %v435, %v436
        %v441 = vunpack.c.l.s4 1966171168
        %v442 = vunpack.c.0.s8 %v441
        %v443 = vlaneseq
        %v444 = vshrl.u32 %v443, 7
        %v445 = vsub.s32 %v442, %v444
        %v446 = vrot.slane %v439, %v445
        %v448 = vunpack.c.l.s4 1966171168
        %v449 = vunpack.c.0.s8 %v448
        %v450 = vlaneseq
        %v451 = vshrl.u32 %v450, 7
        %v452 = vsub.s32 %v449, %v451
        %v453 = vrot.slane %v446, %v452
        %v455 = vadd.f32 %v434, %v453
        %456 = vst.msk [vmem:[#allocation6] sm:$0x3] %vm379, %v455
        %v457 = vld [vmem:[#allocation7] sm:$0x3]
        %v458 = vsel %vm432, %v425, 0.0
        %v459 = vsel %vm433, %v431, 0.0
        %v462 = vcombine.low %v458, %v459
        %v464 = vunpack.c.l.s4 1966171168
        %v465 = vunpack.c.0.s8 %v464
        %v466 = vlaneseq
        %v467 = vshrl.u32 %v466, 7
        %v468 = vsub.s32 %v465, %v467
        %v469 = vrot.slane %v462, %v468
        %v471 = vunpack.c.l.s4 1966171168
        %v472 = vunpack.c.0.s8 %v471
        %v473 = vlaneseq
        %v474 = vshrl.u32 %v473, 7
        %v475 = vsub.s32 %v472, %v474
        %v476 = vrot.slane %v469, %v475
        %v478 = vadd.f32 %v457, %v476
        %479 = vst.msk [vmem:[#allocation7] sm:$0x3] %vm379, %v478
        // Predicated region
        $region41: #{tpu_custom_call.1} parent=27 // pred_check
          %p480 = pneg %p237
        $region42: #{tpu_custom_call.1} parent=27 // pred_check_branch
          %482 = sbr.rel (%p480) target = $region44
        $region43: #{tpu_custom_call.1} parent=27 // pred_region
          %v483 = vld [vmem:[#allocation2] sm:$0xff]
          %v484 = vld [vmem:[#allocation2 + $0x8] sm:$0xff]
          %v485 = vadd.f32 %v483, %v484
          %486 = vadd.xlane.f32.xlu0 %v485
          %v487 = vpop.xlane.xlu0 %486
          %v488 = vrot.slane %v487, 4
          %v489 = vadd.f32 %v487, %v488
          %v490 = vrot.slane %v489, 2
          %v491 = vadd.f32 %v489, %v490
          %v492 = vrot.slane %v491, 1
          %v493 = vadd.f32 %v491, %v492
          %s494 = vtos %v493
          %v495 = vld [vmem:[#allocation3] sm:$0xff]
          %v496 = vld [vmem:[#allocation3 + $0x8] sm:$0xff]
          %v497 = vadd.f32 %v495, %v496
          %498 = vadd.xlane.f32.xlu0 %v497
          %v499 = vpop.xlane.xlu0 %498
          %v500 = vrot.slane %v499, 4
          %v501 = vadd.f32 %v499, %v500
          %v502 = vrot.slane %v501, 2
          %v503 = vadd.f32 %v501, %v502
          %v504 = vrot.slane %v503, 1
          %v505 = vadd.f32 %v503, %v504
          %s506 = vtos %v505
          %v507 = vld [vmem:[#allocation4] sm:$0x3]
          %v509 = vlaneseq
          %v510 = vshrl.u32 %v509, 7
          %v511 = vsub.s32 0, %v510
          %v512 = vrot.slane %v507, %v511
          %v513 = vlaneseq
          %v514 = vshrl.u32 %v513, 7
          %v515 = vsub.s32 1, %v514
          %v516 = vrot.slane %v507, %v515
          %vm519 = vcmask 1040384
          %v520 = vsel %vm519, %v512, 0.0
          %v521 = vsel %vm519, %v516, 0.0
          %v522 = vadd.f32 %v520, %v521
          %523 = vadd.xlane.f32.xlu0 %v522
          %v524 = vpop.xlane.xlu0 %523
          %v525 = vrot.slane %v524, 4
          %v526 = vadd.f32 %v524, %v525
          %v527 = vrot.slane %v526, 2
          %v528 = vadd.f32 %v526, %v527
          %v529 = vrot.slane %v528, 1
          %v530 = vadd.f32 %v528, %v529
          %s531 = vtos %v530
          %v532 = vld [vmem:[#allocation5] sm:$0x3]
          %v534 = vlaneseq
          %v535 = vshrl.u32 %v534, 7
          %v536 = vsub.s32 0, %v535
          %v537 = vrot.slane %v532, %v536
          %v538 = vlaneseq
          %v539 = vshrl.u32 %v538, 7
          %v540 = vsub.s32 1, %v539
          %v541 = vrot.slane %v532, %v540
          %v544 = vsel %vm519, %v537, 0.0
          %v545 = vsel %vm519, %v541, 0.0
          %v546 = vadd.f32 %v544, %v545
          %547 = vadd.xlane.f32.xlu0 %v546
          %v548 = vpop.xlane.xlu0 %547
          %v549 = vrot.slane %v548, 4
          %v550 = vadd.f32 %v548, %v549
          %v551 = vrot.slane %v550, 2
          %v552 = vadd.f32 %v550, %v551
          %v553 = vrot.slane %v552, 1
          %v554 = vadd.f32 %v552, %v553
          %s555 = vtos %v554
          %v556 = vld [vmem:[#allocation6] sm:$0x3]
          %v558 = vlaneseq
          %v559 = vshrl.u32 %v558, 7
          %v560 = vsub.s32 0, %v559
          %v561 = vrot.slane %v556, %v560
          %v562 = vlaneseq
          %v563 = vshrl.u32 %v562, 7
          %v564 = vsub.s32 1, %v563
          %v565 = vrot.slane %v556, %v564
          %v568 = vsel %vm519, %v561, 0.0
          %v569 = vsel %vm519, %v565, 0.0
          %v570 = vadd.f32 %v568, %v569
          %571 = vadd.xlane.f32.xlu0 %v570
          %v572 = vpop.xlane.xlu0 %571
          %v573 = vrot.slane %v572, 4
          %v574 = vadd.f32 %v572, %v573
          %v575 = vrot.slane %v574, 2
          %v576 = vadd.f32 %v574, %v575
          %v577 = vrot.slane %v576, 1
          %v578 = vadd.f32 %v576, %v577
          %s579 = vtos %v578
          %v580 = vld [vmem:[#allocation7] sm:$0x3]
          %v582 = vlaneseq
          %v583 = vshrl.u32 %v582, 7
          %v584 = vsub.s32 0, %v583
          %v585 = vrot.slane %v580, %v584
          %v586 = vlaneseq
          %v587 = vshrl.u32 %v586, 7
          %v588 = vsub.s32 1, %v587
          %v589 = vrot.slane %v580, %v588
          %v592 = vsel %vm519, %v585, 0.0
          %v593 = vsel %vm519, %v589, 0.0
          %v594 = vadd.f32 %v592, %v593
          %595 = vadd.xlane.f32.xlu0 %v594
          %v596 = vpop.xlane.xlu0 %595
          %v597 = vrot.slane %v596, 4
          %v598 = vadd.f32 %v596, %v597
          %v599 = vrot.slane %v598, 2
          %v600 = vadd.f32 %v598, %v599
          %v601 = vrot.slane %v600, 1
          %v602 = vadd.f32 %v600, %v601
          %s603 = vtos %v602
          %vm604 = vcmp.eq.s32.totalorder %v258, 0
          %vm605 = vcmp.eq.s32.totalorder %v258, 1
          %vm606 = vcmp.eq.s32.totalorder %v258, 2
          %vm607 = vcmp.eq.s32.totalorder %v258, 3
          %vm608 = vcmp.eq.s32.totalorder %v258, 4
          %v609 = vstv %s579
          %v610 = vstv %s603
          %v611 = vsel %vm608, %v609, %v610
          %v612 = vstv %s555
          %v613 = vsel %vm607, %v612, %v611
          %v614 = vstv %s531
          %v615 = vsel %vm606, %v614, %v613
          %v616 = vstv %s506
          %v617 = vsel %vm605, %v616, %v615
          %v618 = vstv %s494
          %v619 = vsel %vm604, %v618, %v617
          %620 = vst [vmem:[%s232] sm:$0xff] %v619
        $region44: #{tpu_custom_call.1} parent=27 // pred_fallthru
          _
        %s621 = sand.u32 %s111, 1
        %s622 = scalar_lea.sflag [#allocation10], %s621
        %s623 = sand.u32 %s111, 1
        %s624 = smul.addr %s623, 8
        %s625 = scalar_lea.vmem [#allocation13], %s624
        // Predicated region
        $region45: #{tpu_custom_call.1} parent=27 // pred_check
          %p626 = pneg %p121
        $region46: #{tpu_custom_call.1} parent=27 // pred_check_branch
          %628 = sbr.rel (%p626) target = $region48
        $region47: #{tpu_custom_call.1} parent=27 // pred_region
          %s630 = ssub.s32 128, 128
          %631 = vsyncadd %s622, %s630
          %s632 = sadd.s32 %s28, %s27
          %s633 = smul.addr %s632, 128
          %s634 = scalar_lea.hbm %s2, %s633
          %s636 = sshll.u32 %s625, 4
          %s637 = int_to_ptr.vmem [resolvable:$true] %s636
          %639 = dma.vmem_to_hbm [thread:$0]  %s637, 128, %s634, %s622
        $region48: #{tpu_custom_call.1} parent=27 // pred_fallthru
          _
      $region28: #{tpu_custom_call.1} parent=5 // pred_fallthru
        _
      %p640 = scmp.le.s32.totalorder 2, %s17
      // Predicated region
      $region49: #{tpu_custom_call.1} parent=5 // pred_check
        %p641 = pneg %p640
      $region50: #{tpu_custom_call.1} parent=5 // pred_check_branch
        %643 = sbr.rel (%p641) target = $region52
      $region51: #{tpu_custom_call.1} parent=5 // pred_region
        %s644 = ssub.s32 %s17, 2
        // Predicated region
        $region53: #{tpu_custom_call.1} parent=51 // pred_check
          %p645 = pneg %p127
        $region54: #{tpu_custom_call.1} parent=51 // pred_check_branch
          %647 = sbr.rel (%p645) target = $region56
        $region55: #{tpu_custom_call.1} parent=51 // pred_region
          %s648 = sand.u32 %s112, 1
          %s649 = scalar_lea.sflag [#allocation10], %s648
          %s650 = sand.u32 %s112, 1
          %s651 = smul.addr %s650, 8
          %s652 = scalar_lea.vmem [#allocation13], %s651
          %653 = dma.done %s649, 128
        $region56: #{tpu_custom_call.1} parent=51 // pred_fallthru
          _
      $region52: #{tpu_custom_call.1} parent=5 // pred_fallthru
        _
    $region6: #{tpu_custom_call.1} parent=1 // loop_footer
      %s21 = sadd.s32 1, %s17
    $region7: #{tpu_custom_call.1} parent=1 // loop_footer_branch
      %16 = sbr.rel target = $region3
    $region8: #{tpu_custom_call.1} parent=1 // loop_exit
      _
    %654 = vsyncpa [#allocation9], 1
    %s655 = scalar_lea.sflag [#allocation9], 1
    %656 = vsyncpa %s655, 1
    %657 = vsyncpa [#allocation12], 1
    %s658 = scalar_lea.sflag [#allocation12], 1
    %659 = vsyncpa %s658, 1
    %660 = vsyncpa [#allocation10], 1
    %s661 = scalar_lea.sflag [#allocation10], 1
    %662 = vsyncpa %s661, 1

</llo_original>
